<compile_context>
chip_gen: v6e
topology: v6e:2x2x1
jax: 0.10.0
libtpu: 0.0.40
codegen_flags: <defaults>
</compile_context>

<pallas_src>
import jax
import jax.numpy as jnp
from jax.experimental import pallas as pl
from jax.experimental.pallas import tpu as pltpu

_LANE = 128
_TARGET_BLOCK_BYTES = 2 * 1024 * 1024      # ~2 MiB/block: near HBM roofline and
                                           # safe for in+out double-buffering on
                                           # every generation's default scoped VMEM.
_MAX_SINGLE_BLOCK_BYTES = 8 * 1024 * 1024  # guard for the untiled fallback block.


def _identity_kernel(x_ref, o_ref):
    # Pass-through of the current VMEM tile (pure copy).
    o_ref[...] = x_ref[...]


def _identity_copy_pallas(x: jax.Array) -> jax.Array:
    """Explicit identity copy of `x` via a tiled, lane-dense Pallas TPU kernel."""
    orig_shape = x.shape
    n = x.size
    if n == 0:
        return x
    itemsize = x.dtype.itemsize

    if n % _LANE == 0:
        # Lane-dense 2-D slab: last dim is a multiple of 128 -> full-width
        # vector stores (no masked vst.msk), the biggest single lever here.
        cols = _LANE
        for c in (2048, 1024, 512, 256):
            if n % c == 0:
                cols = c
                break
        rows = n // cols

        # Size the block by bytes (~2 MiB), multiple of 8 rows, exact divisor
        # of `rows` so no padding and no trailing slice are ever needed.
        target = max(8, (_TARGET_BLOCK_BYTES // (cols * itemsize)) // 8 * 8)
        if rows <= target:
            tile_rows = rows            # single block equal to full array dims
        else:
            tile_rows = rows            # fallback if no divisor is found below
            tr = target
            while tr >= 8:
                if rows % tr == 0:
                    tile_rows = tr
                    break
                tr -= 8
    else:
        # Rare lane-sparse case (element count not a multiple of 128):
        # a single block equal to the full array dims (always legal).
        rows, cols, tile_rows = 1, n, 1

    if tile_rows == rows and rows * cols * itemsize > _MAX_SINGLE_BLOCK_BYTES:
        # No clean tiling exists for this size; since the op is an identity,
        # the zero-copy path is both the fastest and always correct.
        return x

    x2 = x.reshape(rows, cols)          # contiguous flatten: layout-only reshape
    grid = (rows // tile_rows,)

    out2 = pl.pallas_call(
        _identity_kernel,
        out_shape=jax.ShapeDtypeStruct((rows, cols), x.dtype),
        grid=grid,
        in_specs=[pl.BlockSpec((tile_rows, cols), lambda i: (i, 0))],
        out_specs=pl.BlockSpec((tile_rows, cols), lambda i: (i, 0)),
        # Alias the input and output HBM buffers: the "copy" is in place, and
        # XLA may elide it entirely when the input is dead afterwards.
        input_output_aliases={0: 0},
        compiler_params=pltpu.CompilerParams(
            # Parallel grid axis -> megacore sharding on v7x (2 TCs/chip).
            dimension_semantics=("parallel",),
        ),
    )(x2)

    return out2.reshape(orig_shape)


def bravo_decoder_forward(x: jax.Array, *, force_kernel: bool = False) -> jax.Array:
    """Forward pass of BraVO_Decoder (identity).

    Default path short-circuits: for an identity, eliminating the read+write
    removes all HBM traffic.  `force_kernel=True` routes through the tiled
    Pallas copy kernel (materializes a fresh buffer on TPU).
    """
    if not force_kernel:
        return x
    return _identity_copy_pallas(x)


if __name__ == "__main__":
    key = jax.random.PRNGKey(0)
    # Small shape consistent with "brain activity -> embedding" usage.
    x = jax.random.normal(key, (2, 4, 16, 16), dtype=jnp.float32)

    # Default (optimal) path: identity short-circuit, zero HBM traffic.
    y_fast = bravo_decoder_forward(x)
    jax.block_until_ready(y_fast)
    assert y_fast.shape == x.shape and y_fast.dtype == x.dtype
    assert bool(jnp.all(y_fast == x))

    # Forced Pallas path: exercises the lane-dense tiled TPU copy kernel.
    y_kern = bravo_decoder_forward(x, force_kernel=True)
    jax.block_until_ready(y_kern)
    assert y_kern.shape == x.shape and y_kern.dtype == x.dtype
    assert bool(jnp.all(y_kern == x))

    print("KERNEL_OK")
</pallas_src>

<mosaic_0001>
module attributes {stable_mosaic.version = 11 : i64} {
  func.func @_identity_kernel(%arg0: i32, %arg1: memref<1x2048xf32, #tpu.memory_space<vmem>>, %arg2: memref<1x2048xf32, #tpu.memory_space<vmem>>) attributes {dimension_semantics = [#tpu.dimension_semantics<parallel>], iteration_bounds = array<i64: 1>, scalar_prefetch = 0 : i64, scratch_operands = 0 : i64, tpu.core_type = #tpu.core_type<tc>, window_params = [{transform_indices = @transform_0, window_bounds = array<i64: 1, 2048>}, {transform_indices = @transform_1, window_bounds = array<i64: 1, 2048>}]} {
    %c0 = arith.constant 0 : index
    %c0_0 = arith.constant 0 : index
    %0 = vector.load %arg1[%c0, %c0_0] : memref<1x2048xf32, #tpu.memory_space<vmem>>, vector<1x2048xf32>
    %c0_1 = arith.constant 0 : index
    %c0_2 = arith.constant 0 : index
    %1 = vector.load %arg2[%c0_1, %c0_2] : memref<1x2048xf32, #tpu.memory_space<vmem>>, vector<1x2048xf32>
    tpu.vector_store %arg2[%c0_1, %c0_2], %0 {strides = array<i32>} : memref<1x2048xf32, #tpu.memory_space<vmem>>, vector<1x2048xf32>,
    return
  }
  func.func @transform_0(%arg0: i32) -> (i32, i32) {
    %c0_i32 = arith.constant 0 : i32
    %c0_i32_0 = arith.constant 0 : i32
    return %arg0, %c0_i32 : i32, i32
  }
  func.func @transform_1(%arg0: i32) -> (i32, i32) {
    %c0_i32 = arith.constant 0 : i32
    %c0_i32_0 = arith.constant 0 : i32
    return %arg0, %c0_i32 : i32, i32
  }
}

</mosaic_0001>

<llo_original>
// kernel: tpu_custom_call.1
$region0: #{tpu_custom_call.1}
  #allocation0 [shape = 'u32[]', space=smem, size = 0x4, offset = 0x4, fixed_abs, tag = 'smem constant byte address 0x4 - core index']
  #allocation1 [shape = 'u32[144,128]{1,0:T(1,128)}', space=vmem, size = 0x12000, scoped, tag = 'internal scratch']
  %s0 = inlined_call_operand.hbm [shape: f32[1,2048], index: 0, kind: input, shape index: {}, may-alias: {0,1}]
  %s1 = inlined_call_operand.hbm [shape: f32[1,2048], index: 1, kind: output, shape index: {}, may-alias: {0,1}]
  %s2 = sld [smem:[#allocation0]]
  $region18: #{tpu_custom_call.1} parent=0
    _
  %s4 = ssub.s32 1, %s2
  %s5 = scalar_select 0, %s4, %s2
  $region1: #{tpu_custom_call.1} parent=0
    #allocation2 [shape = 'u8[8192]{0}', space=vmem, size = 0x2000, scoped, tag = 'input window, operand 0, single buffered']
    #allocation3 [shape = 's32[1]{0}', space=sflag, size = 0x4, scoped, tag = 'scoped memory for tpu_custom_call.1']
    #allocation4 [shape = 's32[1]{0}', space=sflag, size = 0x4, scoped, tag = 'scoped memory for tpu_custom_call.1']
    #allocation5 [shape = 'u8[8192]{0}', space=vmem, size = 0x2000, scoped, tag = 'output window, operand 0, single buffered']
    %6 = vsyncpa [#allocation3], 0
    %7 = vsyncpa [#allocation4], 0
    // Predicated region
    $region2: #{tpu_custom_call.1} parent=1 // pred_check
      _
    $region3: #{tpu_custom_call.1} parent=1 // pred_check_branch
      %9 = sbr.rel (0) target = $region5
    $region4: #{tpu_custom_call.1} parent=1 // pred_region
      %s11 = ssub.s32 256, 256
      %12 = vsyncadd [#allocation3], %s11
      %s14 = sshll.u32 [#allocation2], 4
      %s15 = int_to_ptr.vmem [resolvable:$true] %s14
      %17 = dma.hbm_to_vmem [thread:$0]  %s0, 256, %s15, [#allocation3]
    $region5: #{tpu_custom_call.1} parent=1 // pred_fallthru
      _
    // Predicated region
    $region6: #{tpu_custom_call.1} parent=1 // pred_check
      _
    $region7: #{tpu_custom_call.1} parent=1 // pred_check_branch
      %19 = sbr.rel (0) target = $region9
    $region8: #{tpu_custom_call.1} parent=1 // pred_region
      %20 = dma.done [#allocation3], 256
    $region9: #{tpu_custom_call.1} parent=1 // pred_fallthru
      _
    %v21 = vld [vmem:[#allocation2] sm:$0xff]
    %v22 = vld [vmem:[#allocation2 + $0x8] sm:$0xff]
    %23 = vst [vmem:[#allocation5] sm:$0xff] %v21
    %24 = vst [vmem:[#allocation5 + $0x8] sm:$0xff] %v22
    // Predicated region
    $region10: #{tpu_custom_call.1} parent=1 // pred_check
      _
    $region11: #{tpu_custom_call.1} parent=1 // pred_check_branch
      %26 = sbr.rel (0) target = $region13
    $region12: #{tpu_custom_call.1} parent=1 // pred_region
      %s28 = ssub.s32 256, 256
      %29 = vsyncadd [#allocation4], %s28
      %s31 = sshll.u32 [#allocation5], 4
      %s32 = int_to_ptr.vmem [resolvable:$true] %s31
      %34 = dma.vmem_to_hbm [thread:$0]  %s32, 256, %s1, [#allocation4]
    $region13: #{tpu_custom_call.1} parent=1 // pred_fallthru
      _
    // Predicated region
    $region14: #{tpu_custom_call.1} parent=1 // pred_check
      _
    $region15: #{tpu_custom_call.1} parent=1 // pred_check_branch
      %36 = sbr.rel (0) target = $region17
    $region16: #{tpu_custom_call.1} parent=1 // pred_region
      %37 = dma.done [#allocation4], 256
    $region17: #{tpu_custom_call.1} parent=1 // pred_fallthru
      _
    %38 = vsyncpa [#allocation3], 1
    %39 = vsyncpa [#allocation4], 1

</llo_original>
